<compile_context>
chip_gen: v5e
topology: v5e:2x2
jax: 0.10.0
libtpu: 0.0.40
codegen_flags: <defaults>
</compile_context>

<pallas_src>
import jax
import jax.numpy as jnp
from jax.experimental import pallas as pl
from jax.experimental.pallas import tpu as pltpu


# ---------------------------------------------------------------------------
# Fused FFN kernel: one (tm, d_model) row-tile per grid step.
#   x_ref : (tm, d_model)  input dtype (f32)
#   w1_ref: (d_model, d_ff)  bf16, resident (Buffered(1))
#   b1_ref: (1, d_ff)        f32
#   w2_ref: (d_ff, d_model)  bf16, resident (Buffered(1))
#   b2_ref: (1, d_model)     f32
#   o_ref : (tm, d_model)
# ---------------------------------------------------------------------------
def _ffn_kernel(x_ref, w1_ref, b1_ref, w2_ref, b2_ref, o_ref):
    x = x_ref[...].astype(jnp.bfloat16)
    # linear 1 (bf16 MXU, f32 accumulate) + bias + ReLU; hidden stays in VMEM.
    h = jnp.dot(x, w1_ref[...], preferred_element_type=jnp.float32)
    h = jnp.maximum(h + b1_ref[...], 0.0)
    # linear 2 (bf16 MXU, f32 accumulate) + bias
    y = jnp.dot(h.astype(jnp.bfloat16), w2_ref[...],
                preferred_element_type=jnp.float32)
    y = y + b2_ref[...]
    o_ref[...] = y.astype(o_ref.dtype)


def _vmem_caps():
    """(tile-selection budget, compiler vmem_limit_bytes), generation-aware."""
    try:
        cap = int(pltpu.get_tpu_info().vmem_capacity_bytes)
    except Exception:
        cap = 64 << 20  # conservative fallback (v7x per-TC VMEM)
    return int(cap * 0.70), int(cap * 0.90)


def _choose_row_tile(M, d_model, d_ff, x_itemsize, w_itemsize, vmem_budget):
    """Pick an MXU-friendly row tile that fits the VMEM budget.

    Accounting matches the actual kernel: double-buffered x/out tiles,
    single-buffered bf16 weights (Buffered(1)), plus the f32 hidden and
    second-dot accumulator the compiler must materialize.
    """
    M8 = -(-M // 8) * 8  # round rows up to the sublane granule

    def vmem_bytes(tm):
        act = 2 * tm * d_model * x_itemsize          # x tile, double-buffered
        out = 2 * tm * d_model * x_itemsize          # out tile, double-buffered
        wts = 2 * d_model * d_ff * w_itemsize        # w1^T + w2^T, single buffer
        bias = (d_ff + d_model) * 4
        hid = tm * d_ff * 4                          # f32 hidden (ReLU input)
        acc = tm * d_model * 4                       # f32 second-dot accumulator
        return act + out + wts + bias + hid + acc

    if M8 <= 256:
        return M8  # tiny problem: one small block (rows already multiple of 8)

    tm = 128
    for cand in (2048, 1024, 512, 256, 128):
        if vmem_bytes(cand) <= vmem_budget:
            tm = cand
            break
    # Prefer >= 2 grid steps so the "parallel" row axis can split across
    # v7x's two TensorCores.
    while tm > 128 and -(-M8 // tm) < 2:
        tm //= 2
    return tm


def prepare_ffn_params(params):
    """One-time prep (do this at model-load time, NOT per forward call):
    pre-transpose to (in, out) layout and cast weights to bf16 for the MXU."""
    return {
        "w1t": jnp.asarray(params["w1"]).T.astype(jnp.bfloat16),   # (d_model, d_ff)
        "b1": jnp.asarray(params["b1"]).reshape(1, -1).astype(jnp.float32),
        "w2t": jnp.asarray(params["w2"]).T.astype(jnp.bfloat16),   # (d_ff, d_model)
        "b2": jnp.asarray(params["b2"]).reshape(1, -1).astype(jnp.float32),
    }


def positionwise_feed_forward(prepared, x):
    """
    prepared: output of prepare_ffn_params (bf16 (in,out)-layout weights).
    x:        (bs, L, d_model) float32
    returns   (bs, L, d_model) float32
    """
    bs, L, d_model = x.shape
    d_ff = prepared["w1t"].shape[1]
    M = bs * L

    vmem_budget, vmem_limit = _vmem_caps()
    tm = _choose_row_tile(M, d_model, d_ff,
                          x_itemsize=x.dtype.itemsize,
                          w_itemsize=prepared["w1t"].dtype.itemsize,
                          vmem_budget=vmem_budget)

    # Pad rows up to a tile multiple (masked/padded last tile instead of
    # requiring M % tm == 0).  Padded rows are computed and discarded.
    n_tiles = pl.cdiv(M, tm)
    M_pad = n_tiles * tm

    x2d = x.reshape(M, d_model)
    if M_pad != M:
        x2d = jnp.pad(x2d, ((0, M_pad - M), (0, 0)))

    resident = pl.Buffered(1)  # grid-invariant operands: single VMEM buffer

    out2d = pl.pallas_call(
        _ffn_kernel,
        out_shape=jax.ShapeDtypeStruct((M_pad, d_model), x.dtype),
        grid_spec=pltpu.PrefetchScalarGridSpec(
            num_scalar_prefetch=0,
            grid=(n_tiles,),
            in_specs=[
                pl.BlockSpec((tm, d_model), lambda i: (i, 0)),     # x row tile
                pl.BlockSpec((d_model, d_ff), lambda i: (0, 0),
                             pipeline_mode=resident),              # w1^T
                pl.BlockSpec((1, d_ff), lambda i: (0, 0),
                             pipeline_mode=resident),              # b1
                pl.BlockSpec((d_ff, d_model), lambda i: (0, 0),
                             pipeline_mode=resident),              # w2^T
                pl.BlockSpec((1, d_model), lambda i: (0, 0),
                             pipeline_mode=resident),              # b2
            ],
            out_specs=pl.BlockSpec((tm, d_model), lambda i: (i, 0)),
        ),
        compiler_params=pltpu.CompilerParams(
            dimension_semantics=("parallel",),
            vmem_limit_bytes=vmem_limit),
    )(x2d, prepared["w1t"], prepared["b1"], prepared["w2t"], prepared["b2"])

    if M_pad != M:
        out2d = out2d[:M]
    return out2d.reshape(bs, L, d_model)


# ---------------------------------------------------------------------------
# Pure-JAX f32 reference (PyTorch semantics, eval mode).
# ---------------------------------------------------------------------------
def reference(params, x):
    h = x @ params["w1"].T + params["b1"]
    h = jnp.maximum(h, 0.0)
    return h @ params["w2"].T + params["b2"]


if __name__ == "__main__":
    bs, L, d_model, d_ff = 2, 8, 32, 128

    root = jax.random.PRNGKey(0)
    keys = jax.random.split(root, 5)

    def w_init(k, shape, scale=0.05):
        return (scale * jax.random.normal(k, shape)).astype(jnp.float32)

    params = {
        "w1": w_init(keys[0], (d_ff, d_model)),
        "b1": w_init(keys[1], (d_ff,)),
        "w2": w_init(keys[2], (d_model, d_ff)),
        "b2": w_init(keys[3], (d_model,)),
    }
    x = jax.random.normal(keys[4], (bs, L, d_model), jnp.float32)

    prepared = prepare_ffn_params(params)          # one-time weight prep
    out = positionwise_feed_forward(prepared, x)
    out = jax.block_until_ready(out)

    ref = reference(params, x)

    assert out.shape == (bs, L, d_model)
    # bf16 MXU inputs (f32 accumulation) -> relaxed tolerance vs f32 reference.
    assert jnp.allclose(out, ref, atol=2e-2, rtol=2e-2), (
        float(jnp.max(jnp.abs(out - ref))))

    print("KERNEL_OK")
</pallas_src>

<mosaic_0001>
module attributes {stable_mosaic.version = 11 : i64} {
  func.func @_ffn_kernel(%arg0: i32, %arg1: memref<16x32xf32, #tpu.memory_space<vmem>>, %arg2: memref<32x128xbf16, #tpu.memory_space<vmem>>, %arg3: memref<1x128xf32, #tpu.memory_space<vmem>>, %arg4: memref<128x32xbf16, #tpu.memory_space<vmem>>, %arg5: memref<1x32xf32, #tpu.memory_space<vmem>>, %arg6: memref<16x32xf32, #tpu.memory_space<vmem>>) attributes {dimension_semantics = [#tpu.dimension_semantics<parallel>], iteration_bounds = array<i64: 1>, scalar_prefetch = 0 : i64, scratch_operands = 0 : i64, tpu.core_type = #tpu.core_type<tc>, window_params = [{transform_indices = @transform_0, window_bounds = array<i64: 16, 32>}, {pipeline_mode = #tpu.pipeline_mode<synchronous>, transform_indices = @transform_1, window_bounds = array<i64: 32, 128>}, {pipeline_mode = #tpu.pipeline_mode<synchronous>, transform_indices = @transform_2, window_bounds = array<i64: 1, 128>}, {pipeline_mode = #tpu.pipeline_mode<synchronous>, transform_indices = @transform_3, window_bounds = array<i64: 128, 32>}, {pipeline_mode = #tpu.pipeline_mode<synchronous>, transform_indices = @transform_4, window_bounds = array<i64: 1, 32>}, {transform_indices = @transform_5, window_bounds = array<i64: 16, 32>}]} {
    %c0 = arith.constant 0 : index
    %c0_0 = arith.constant 0 : index
    %0 = vector.load %arg1[%c0, %c0_0] : memref<16x32xf32, #tpu.memory_space<vmem>>, vector<16x32xf32>
    %1 = arith.truncf %0 : vector<16x32xf32> to vector<16x32xbf16>
    %c0_1 = arith.constant 0 : index
    %c0_2 = arith.constant 0 : index
    %2 = vector.load %arg2[%c0_1, %c0_2] : memref<32x128xbf16, #tpu.memory_space<vmem>>, vector<32x128xbf16>
    %cst = arith.constant dense<0.000000e+00> : vector<16x128xf32>
    %3 = tpu.matmul %1, %2, %cst {dimension_numbers = #tpu.dot_dimension_numbers<[1], [0], [0], [1], [0, 0, 1, 1], [], []>} : vector<16x32xbf16>, vector<32x128xbf16>, vector<16x128xf32> -> vector<16x128xf32>
    %c0_3 = arith.constant 0 : index
    %c0_4 = arith.constant 0 : index
    %4 = vector.load %arg3[%c0_3, %c0_4] : memref<1x128xf32, #tpu.memory_space<vmem>>, vector<1x128xf32>
    %5 = vector.broadcast %4 : vector<1x128xf32> to vector<16x128xf32>
    %6 = arith.addf %3, %5 : vector<16x128xf32>
    %cst_5 = arith.constant 0.000000e+00 : f32
    %7 = vector.broadcast %cst_5 : f32 to vector<16x128xf32>
    %8 = arith.maximumf %6, %7 : vector<16x128xf32>
    %9 = arith.truncf %8 : vector<16x128xf32> to vector<16x128xbf16>
    %c0_6 = arith.constant 0 : index
    %c0_7 = arith.constant 0 : index
    %10 = vector.load %arg4[%c0_6, %c0_7] : memref<128x32xbf16, #tpu.memory_space<vmem>>, vector<128x32xbf16>
    %cst_8 = arith.constant dense<0.000000e+00> : vector<16x32xf32>
    %11 = tpu.matmul %9, %10, %cst_8 {dimension_numbers = #tpu.dot_dimension_numbers<[1], [0], [0], [1], [0, 0, 1, 1], [], []>} : vector<16x128xbf16>, vector<128x32xbf16>, vector<16x32xf32> -> vector<16x32xf32>
    %c0_9 = arith.constant 0 : index
    %c0_10 = arith.constant 0 : index
    %12 = vector.load %arg5[%c0_9, %c0_10] : memref<1x32xf32, #tpu.memory_space<vmem>>, vector<1x32xf32>
    %13 = vector.broadcast %12 : vector<1x32xf32> to vector<16x32xf32>
    %14 = arith.addf %11, %13 : vector<16x32xf32>
    %c0_11 = arith.constant 0 : index
    %c0_12 = arith.constant 0 : index
    %15 = vector.load %arg6[%c0_11, %c0_12] : memref<16x32xf32, #tpu.memory_space<vmem>>, vector<16x32xf32>
    tpu.vector_store %arg6[%c0_11, %c0_12], %14 {strides = array<i32>} : memref<16x32xf32, #tpu.memory_space<vmem>>, vector<16x32xf32>,
    return
  }
  func.func @transform_0(%arg0: i32) -> (i32, i32) {
    %c0_i32 = arith.constant 0 : i32
    %c0_i32_0 = arith.constant 0 : i32
    return %arg0, %c0_i32 : i32, i32
  }
  func.func @transform_1(%arg0: i32) -> (i32, i32) {
    %c0_i32 = arith.constant 0 : i32
    %c0_i32_0 = arith.constant 0 : i32
    %c0_i32_1 = arith.constant 0 : i32
    return %c0_i32, %c0_i32_0 : i32, i32
  }
  func.func @transform_2(%arg0: i32) -> (i32, i32) {
    %c0_i32 = arith.constant 0 : i32
    %c0_i32_0 = arith.constant 0 : i32
    %c0_i32_1 = arith.constant 0 : i32
    return %c0_i32, %c0_i32_0 : i32, i32
  }
  func.func @transform_3(%arg0: i32) -> (i32, i32) {
    %c0_i32 = arith.constant 0 : i32
    %c0_i32_0 = arith.constant 0 : i32
    %c0_i32_1 = arith.constant 0 : i32
    return %c0_i32, %c0_i32_0 : i32, i32
  }
  func.func @transform_4(%arg0: i32) -> (i32, i32) {
    %c0_i32 = arith.constant 0 : i32
    %c0_i32_0 = arith.constant 0 : i32
    %c0_i32_1 = arith.constant 0 : i32
    return %c0_i32, %c0_i32_0 : i32, i32
  }
  func.func @transform_5(%arg0: i32) -> (i32, i32) {
    %c0_i32 = arith.constant 0 : i32
    %c0_i32_0 = arith.constant 0 : i32
    return %arg0, %c0_i32 : i32, i32
  }
}

</mosaic_0001>

<llo_original>
// kernel: tpu_custom_call.1
$region0: #{tpu_custom_call.1}
  #allocation0 [shape = 'u32[]', space=smem, size = 0x4, offset = 0x4, fixed_abs, tag = 'smem constant byte address 0x4 - core index']
  #allocation1 [shape = 'u32[72,128]{1,0:T(1,128)}', space=vmem, size = 0x9000, scoped, tag = 'internal scratch']
  %s0 = inlined_call_operand.vmem [shape: f32[16,32], index: 0, kind: input, shape index: {}]
  %s1 = inlined_call_operand.vmem [shape: bf16[32,128], index: 1, kind: input, shape index: {}]
  %s2 = inlined_call_operand.vmem [shape: f32[1,128], index: 2, kind: input, shape index: {}]
  %s3 = inlined_call_operand.vmem [shape: bf16[128,32], index: 3, kind: input, shape index: {}]
  %s4 = inlined_call_operand.vmem [shape: f32[1,32], index: 4, kind: input, shape index: {}]
  %s5 = inlined_call_operand.hbm [shape: f32[16,32], index: 5, kind: output, shape index: {}]
  %s6 = sld [smem:[#allocation0]]
  $region30: #{tpu_custom_call.1} parent=0
    _
  %s8 = ssub.s32 1, %s6
  %s9 = scalar_select 0, %s8, %s6
  $region1: #{tpu_custom_call.1} parent=0
    #allocation2 [shape = 'u8[8192]{0}', space=vmem, size = 0x2000, scoped, tag = 'output window, operand 0, single buffered']
    #allocation3 [shape = 's32[1]{0}', space=sflag, size = 0x4, scoped, tag = 'scoped memory for tpu_custom_call.1']
    %10 = vsyncpa [#allocation3], 0
    // Predicated region
    $region2: #{tpu_custom_call.1} parent=1 // pred_check
      _
    $region3: #{tpu_custom_call.1} parent=1 // pred_check_branch
      %12 = sbr.rel (0) target = $region5
    $region4: #{tpu_custom_call.1} parent=1 // pred_region
      _
    $region5: #{tpu_custom_call.1} parent=1 // pred_fallthru
      _
    // Predicated region
    $region6: #{tpu_custom_call.1} parent=1 // pred_check
      _
    $region7: #{tpu_custom_call.1} parent=1 // pred_check_branch
      %14 = sbr.rel (0) target = $region9
    $region8: #{tpu_custom_call.1} parent=1 // pred_region
      _
    $region9: #{tpu_custom_call.1} parent=1 // pred_fallthru
      _
    // Predicated region
    $region10: #{tpu_custom_call.1} parent=1 // pred_check
      _
    $region11: #{tpu_custom_call.1} parent=1 // pred_check_branch
      %16 = sbr.rel (0) target = $region13
    $region12: #{tpu_custom_call.1} parent=1 // pred_region
      _
    $region13: #{tpu_custom_call.1} parent=1 // pred_fallthru
      _
    // Predicated region
    $region14: #{tpu_custom_call.1} parent=1 // pred_check
      _
    $region15: #{tpu_custom_call.1} parent=1 // pred_check_branch
      %18 = sbr.rel (0) target = $region17
    $region16: #{tpu_custom_call.1} parent=1 // pred_region
      _
    $region17: #{tpu_custom_call.1} parent=1 // pred_fallthru
      _
    // Predicated region
    $region18: #{tpu_custom_call.1} parent=1 // pred_check
      _
    $region19: #{tpu_custom_call.1} parent=1 // pred_check_branch
      %20 = sbr.rel (0) target = $region21
    $region20: #{tpu_custom_call.1} parent=1 // pred_region
      _
    $region21: #{tpu_custom_call.1} parent=1 // pred_fallthru
      _
    %v22 = vld [vmem:[%s0] sm:$0xff]
    %v23 = vld [vmem:[%s0 + $0x8] sm:$0xff]
    %v24 = vpack.c.bf16 %v23, %v22
    %v25 = vld [vmem:[%s1] sm:$0xf]
    %v26 = vld [vmem:[%s1 + $0x4] sm:$0xf]
    %v27 = vld [vmem:[%s1 + $0x8] sm:$0xf]
    %v28 = vld [vmem:[%s1 + $0xc] sm:$0xf]
    %v29 = vld [vmem:[%s2] sm:$0x1]
    %v31 = vperm.slane %v29, 0
    %v37 = vunpack.c.l.b16 %v25
    %v38 = vunpack.c.l.b16 %v26
    %v39 = vunpack.c.l.b16 %v27
    %v40 = vunpack.c.l.b16 %v28
    %v41 = vpack.c.b16 %v38, %v37
    %v42 = vpack.c.b16 %v40, %v39
    %vm45 = vcmask 261120
    %v47 = vsel %vm45, %v24, 0
    %49 = vmatpush.bf16.msra.mxu0 0
    %50 = vmatpush.bf16.msra.mxu0 0
    %51 = vmatpush.bf16.msra.mxu0 0
    %52 = vmatpush.bf16.msra.mxu0 0
    %53 = vmatpush.bf16.msra.mxu0 0
    %54 = vmatpush.bf16.msra.mxu0 0
    %55 = vmatpush.bf16.msra.mxu0 %v42
    %56 = vmatpush.bf16.msra.mxu0 %v41
    %57 = vmatmul.bf16.gmra.mxu0 %v47
    %v58 = vpop.f32.mrf.mxu0
    %v59 = vadd.f32 %v31, %v58
    %v60 = vpop.f32.mrf.mxu0
    %v61 = vadd.f32 %v31, %v60
    %62 = vdwg.mxu0
    %v63 = vmax.f32 %v59, 0.0
    %v64 = vmax.f32 %v61, 0.0
    %v65 = vpack.c.bf16 %v64, %v63
    %v66 = vld [vmem:[%s3] sm:$0xf]
    %v67 = vld [vmem:[%s3 + $0x4] sm:$0xf]
    %v68 = vld [vmem:[%s3 + $0x8] sm:$0xf]
    %v69 = vld [vmem:[%s3 + $0xc] sm:$0xf]
    %v70 = vld [vmem:[%s3 + $0x10] sm:$0xf]
    %v71 = vld [vmem:[%s3 + $0x14] sm:$0xf]
    %v72 = vld [vmem:[%s3 + $0x18] sm:$0xf]
    %v73 = vld [vmem:[%s3 + $0x1c] sm:$0xf]
    %v74 = vld [vmem:[%s3 + $0x20] sm:$0xf]
    %v75 = vld [vmem:[%s3 + $0x24] sm:$0xf]
    %v76 = vld [vmem:[%s3 + $0x28] sm:$0xf]
    %v77 = vld [vmem:[%s3 + $0x2c] sm:$0xf]
    %v78 = vld [vmem:[%s3 + $0x30] sm:$0xf]
    %v79 = vld [vmem:[%s3 + $0x34] sm:$0xf]
    %v80 = vld [vmem:[%s3 + $0x38] sm:$0xf]
    %v81 = vld [vmem:[%s3 + $0x3c] sm:$0xf]
    %v82 = vld [vmem:[%s4] sm:$0x1]
    %v84 = vperm.slane %v82, 0
    %v102 = vunpack.c.l.b16 %v66
    %v103 = vunpack.c.l.b16 %v67
    %v104 = vunpack.c.l.b16 %v68
    %v105 = vunpack.c.l.b16 %v69
    %v106 = vunpack.c.l.b16 %v70
    %v107 = vunpack.c.l.b16 %v71
    %v108 = vunpack.c.l.b16 %v72
    %v109 = vunpack.c.l.b16 %v73
    %v110 = vunpack.c.l.b16 %v74
    %v111 = vunpack.c.l.b16 %v75
    %v112 = vunpack.c.l.b16 %v76
    %v113 = vunpack.c.l.b16 %v77
    %v114 = vunpack.c.l.b16 %v78
    %v115 = vunpack.c.l.b16 %v79
    %v116 = vunpack.c.l.b16 %v80
    %v117 = vunpack.c.l.b16 %v81
    %v118 = vpack.c.b16 %v103, %v102
    %v119 = vpack.c.b16 %v105, %v104
    %v120 = vpack.c.b16 %v107, %v106
    %v121 = vpack.c.b16 %v109, %v108
    %v122 = vpack.c.b16 %v111, %v110
    %v123 = vpack.c.b16 %v113, %v112
    %v124 = vpack.c.b16 %v115, %v114
    %v125 = vpack.c.b16 %v117, %v116
    %134 = vmatpush.bf16.msra.mxu0 %v125
    %135 = vmatpush.bf16.msra.mxu0 %v124
    %136 = vmatpush.bf16.msra.mxu0 %v123
    %137 = vmatpush.bf16.msra.mxu0 %v122
    %138 = vmatpush.bf16.msra.mxu0 %v121
    %139 = vmatpush.bf16.msra.mxu0 %v120
    %140 = vmatpush.bf16.msra.mxu0 %v119
    %141 = vmatpush.bf16.msra.mxu0 %v118
    %142 = vmatmul.bf16.gmra.mxu0 %v65
    %v143 = vpop.f32.mrf.mxu0
    %v144 = vadd.f32 %v84, %v143
    %v145 = vpop.f32.mrf.mxu0
    %v146 = vadd.f32 %v84, %v145
    %147 = vdwg.mxu0
    %148 = vst.msk [vmem:[#allocation2] sm:$0xff] %vm45, %v144
    %149 = vst.msk [vmem:[#allocation2 + $0x8] sm:$0xff] %vm45, %v146
    // Predicated region
    $region22: #{tpu_custom_call.1} parent=1 // pred_check
      _
    $region23: #{tpu_custom_call.1} parent=1 // pred_check_branch
      %151 = sbr.rel (0) target = $region25
    $region24: #{tpu_custom_call.1} parent=1 // pred_region
      %153 = vsyncadd [#allocation3], 0
      %s154 = sshll.u32 [#allocation2], 4
      %s155 = int_to_ptr.vmem [resolvable:$true] %s154
      %s156 = sshll.u32 %s5, 4
      %s157 = int_to_ptr.hbm [resolvable:$true] %s156
      %162 = dma.vmem_to_hbm [thread:$0]  %s155, 256, %s157, [#allocation3], 128, 128, 8
    $region25: #{tpu_custom_call.1} parent=1 // pred_fallthru
      _
    // Predicated region
    $region26: #{tpu_custom_call.1} parent=1 // pred_check
      _
    $region27: #{tpu_custom_call.1} parent=1 // pred_check_branch
      %164 = sbr.rel (0) target = $region29
    $region28: #{tpu_custom_call.1} parent=1 // pred_region
      %166 = dma.done [#allocation3], 256
    $region29: #{tpu_custom_call.1} parent=1 // pred_fallthru
      _
    %167 = vsyncpa [#allocation3], 1

</llo_original>
